<compile_context>
chip_gen: v5e
topology: v5e:2x2
jax: 0.10.0
libtpu: 0.0.40
codegen_flags: <defaults>
</compile_context>

<pallas_src>
import functools

import jax
import jax.numpy as jnp
from jax.experimental import pallas as pl
from jax.experimental.pallas import tpu as pltpu


def _round_up(x, m):
    return -(-x // m) * m


def _padded_bytes(shape, itemsize):
    """Bytes a block occupies in VMEM (last dim -> 128 lanes, 2nd-last -> 8 sublanes)."""
    shape = tuple(int(d) for d in shape)
    if len(shape) == 1:
        shape = (1,) + shape
    lead, sub, lane = shape[:-2], shape[-2], shape[-1]
    n = itemsize * _round_up(sub, 8) * _round_up(lane, 128)
    for d in lead:
        n *= d
    return n


def _vmem_budget_bytes(tb, obs_dim, out_dim, obs_itemsize, params):
    """Explicit scoped-VMEM budget: double-buffered streams + resident weights + slack."""
    est = 2 * _padded_bytes((tb, obs_dim), obs_itemsize)      # obs double buffer
    est += 2 * _padded_bytes((out_dim, tb), 4)                # lane-dense out double buffer
    widths = [obs_dim]
    for w, b in params:
        est += _padded_bytes(w.shape, w.dtype.itemsize)
        est += _padded_bytes(b.shape, b.dtype.itemsize)
        widths.append(int(w.shape[-1]))
    est += 4 * _padded_bytes((tb, max(widths)), 4)            # f32 intermediates headroom
    # 2x safety margin, floor 8 MiB, cap well under v7x's 64 MiB physical VMEM.
    return int(min(48 * 2**20, max(8 * 2**20, 2 * est)))


def _make_critic_kernel(n_layers):
    """Kernel refs: (x_ref, w0, b0, ..., w_{L-1}^T, b_{L-1}^T, out_ref).

    Hidden-layer weights are (in, out); the FINAL layer's weight/bias arrive
    pre-transposed as (out_dim, in) / (out_dim, 1) so the kernel emits a
    lane-dense (out_dim, TB) result directly off the MXU.
    """

    def kernel(x_ref, *refs):
        out_ref = refs[-1]
        param_refs = refs[:-1]

        h = x_ref[...]                                         # (TB, obs_dim) f32/bf16
        for j in range(n_layers - 1):
            w = param_refs[2 * j][...]                         # (in, out), VMEM-resident
            b = param_refs[2 * j + 1][...].astype(jnp.float32)  # (1, out)
            z = jnp.dot(h.astype(w.dtype), w,
                        preferred_element_type=jnp.float32) + b  # (TB, out) f32
            # Softmax over the feature axis (PyTorch nn.Softmax() dim=1 on 2-D input).
            m = jnp.max(z, axis=-1, keepdims=True)
            e = jnp.exp(z - m)
            denom = jnp.sum(e, axis=-1, keepdims=True)
            h = e * pl.reciprocal(denom, approx=True)           # EUP vrcp (free slot)

        # Final Linear, lane-dense orientation: contract (out_dim, in) against the
        # feature axis of h (TB, in)  ->  (out_dim, TB), batch on lanes.
        wT = param_refs[2 * (n_layers - 1)][...]                # (out_dim, in)
        bT = param_refs[2 * (n_layers - 1) + 1][...].astype(jnp.float32)  # (out_dim, 1)
        z = jax.lax.dot_general(
            wT, h.astype(wT.dtype),
            dimension_numbers=(((1,), (1,)), ((), ())),
            preferred_element_type=jnp.float32) + bT
        out_ref[...] = z.astype(out_ref.dtype)

    return kernel


@functools.partial(jax.jit, static_argnames=("block_batch", "compute_dtype"))
def custom_critic_forward(obs, params, *, block_batch=512, compute_dtype=None):
    """obs: (B, sizes[0]).  params: list of (W, b) with W (in, out), b (1, out).

    Returns (B,) when the final out_features == 1 (matching torch.squeeze(-1)),
    otherwise (B, out_dim).
    """
    n_layers = len(params)
    batch, obs_dim = obs.shape
    out_dim = int(params[-1][0].shape[1])

    # Batch tile: multiple of 128 -> obs blocks are sublane-aligned and the
    # lane-dense output blocks are 128-lane aligned; never larger than needed.
    tb = _round_up(min(block_batch, batch), 128)
    num_tiles = -(-batch // tb)
    padded_batch = num_tiles * tb

    vmem_limit = _vmem_budget_bytes(tb, obs_dim, out_dim,
                                    jnp.dtype(compute_dtype or obs.dtype).itemsize,
                                    params)

    if compute_dtype is not None:
        obs = obs.astype(compute_dtype)

    flat_args = [obs]
    in_specs = [pl.BlockSpec((tb, obs_dim), lambda i: (i, 0))]   # streamed over batch
    for j, (w, b) in enumerate(params):
        if compute_dtype is not None:
            w = w.astype(compute_dtype)
        if j == n_layers - 1:
            w = w.T                     # (out_dim, in)  -> lane-dense final matmul
            b = b.T                     # (out_dim, 1)
        flat_args += [w, b]
        # Full-array blocks with constant index_map: resident in VMEM for all steps.
        in_specs += [pl.BlockSpec(w.shape, lambda i: (0, 0)),
                     pl.BlockSpec(b.shape, lambda i: (0, 0))]

    kernel = _make_critic_kernel(n_layers)

    out_slab = pl.pallas_call(
        kernel,
        grid=(num_tiles,),
        out_shape=jax.ShapeDtypeStruct((out_dim, padded_batch), jnp.float32),
        in_specs=in_specs,
        # Lane-dense output: batch lives on the lane axis -> unmasked 128-wide stores.
        out_specs=pl.BlockSpec((out_dim, tb), lambda i: (0, i)),
        compiler_params=pltpu.CompilerParams(
            dimension_semantics=("parallel",),   # shard batch tiles across v7x's 2 TCs
            vmem_limit_bytes=vmem_limit,
        ),
        # TODO(synk): if the obs DMA is still exposed at very large batch, raise the
        # obs in_spec buffering via pipeline_mode=pl.Buffered(3).
    )(*flat_args)

    out = out_slab[:, :batch]            # drop padded rows from the last tile
    if out_dim == 1:
        return out[0]                    # torch.squeeze(v, -1): (B, 1) -> (B,)
    return out.T


def init_params(sizes, key):
    """Deterministic init matching nn.Linear shapes: W (in, out), b (1, out)."""
    params = []
    for j in range(len(sizes) - 1):
        key, kw, kb = jax.random.split(key, 3)
        fan_in = sizes[j]
        bound = 1.0 / jnp.sqrt(jnp.float32(fan_in))
        w = jax.random.uniform(kw, (sizes[j], sizes[j + 1]),
                               minval=-bound, maxval=bound, dtype=jnp.float32)
        b = jax.random.uniform(kb, (1, sizes[j + 1]),
                               minval=-bound, maxval=bound, dtype=jnp.float32)
        params.append((w, b))
    return params


def _reference_forward(obs, params):
    """Plain-JAX reference (exact softmax divide) for correctness check."""
    h = obs.astype(jnp.float32)
    n = len(params)
    for j, (w, b) in enumerate(params):
        z = h @ w + b
        if j < n - 1:
            z = jax.nn.softmax(z, axis=-1)
        h = z
    if h.shape[-1] == 1:
        h = jnp.squeeze(h, axis=-1)
    return h


if __name__ == "__main__":
    # Value critic: sizes = [obs_dim, h1, h2, 1].  batch=200 with block_batch=128
    # exercises the grid (2 tiles) and the padded final tile.
    sizes = [16, 32, 32, 1]
    batch = 200

    key = jax.random.PRNGKey(0)
    key, k_obs = jax.random.split(key)
    obs = jax.random.normal(k_obs, (batch, sizes[0]), dtype=jnp.float32)
    params = init_params(sizes, key)

    ref = _reference_forward(obs, params)

    # f32 streaming path (approx reciprocal in softmax -> loosen tolerance slightly).
    out = jax.block_until_ready(custom_critic_forward(obs, params, block_batch=128))
    assert out.shape == (batch,), out.shape
    assert jnp.allclose(out, ref, atol=1e-2, rtol=1e-2), (out[:4], ref[:4])

    # bf16 streaming path: halves the dominant obs HBM stream; f32 accumulation/softmax.
    out_bf16 = jax.block_until_ready(
        custom_critic_forward(obs, params, block_batch=128,
                              compute_dtype=jnp.bfloat16))
    assert out_bf16.shape == (batch,), out_bf16.shape
    assert jnp.allclose(out_bf16, ref, atol=3e-2, rtol=3e-2), (out_bf16[:4], ref[:4])

    print("KERNEL_OK")
</pallas_src>

<mosaic_0001>
module attributes {stable_mosaic.version = 11 : i64} {
  func.func @kernel(%arg0: i32, %arg1: memref<128x16xf32, #tpu.memory_space<vmem>>, %arg2: memref<16x32xf32, #tpu.memory_space<vmem>>, %arg3: memref<1x32xf32, #tpu.memory_space<vmem>>, %arg4: memref<32x32xf32, #tpu.memory_space<vmem>>, %arg5: memref<1x32xf32, #tpu.memory_space<vmem>>, %arg6: memref<1x32xf32, #tpu.memory_space<vmem>>, %arg7: memref<1x1xf32, #tpu.memory_space<vmem>>, %arg8: memref<1x128xf32, #tpu.memory_space<vmem>>) attributes {dimension_semantics = [#tpu.dimension_semantics<parallel>], iteration_bounds = array<i64: 2>, scalar_prefetch = 0 : i64, scratch_operands = 0 : i64, tpu.core_type = #tpu.core_type<tc>, window_params = [{transform_indices = @transform_0, window_bounds = array<i64: 128, 16>}, {pipeline_mode = #tpu.pipeline_mode<synchronous>, transform_indices = @transform_1, window_bounds = array<i64: 16, 32>}, {pipeline_mode = #tpu.pipeline_mode<synchronous>, transform_indices = @transform_2, window_bounds = array<i64: 1, 32>}, {pipeline_mode = #tpu.pipeline_mode<synchronous>, transform_indices = @transform_3, window_bounds = array<i64: 32, 32>}, {pipeline_mode = #tpu.pipeline_mode<synchronous>, transform_indices = @transform_4, window_bounds = array<i64: 1, 32>}, {pipeline_mode = #tpu.pipeline_mode<synchronous>, transform_indices = @transform_5, window_bounds = array<i64: 1, 32>}, {pipeline_mode = #tpu.pipeline_mode<synchronous>, transform_indices = @transform_6, window_bounds = array<i64: 1, 1>}, {transform_indices = @transform_7, window_bounds = array<i64: 1, 128>}]} {
    %c0 = arith.constant 0 : index
    %c0_0 = arith.constant 0 : index
    %0 = vector.load %arg1[%c0, %c0_0] : memref<128x16xf32, #tpu.memory_space<vmem>>, vector<128x16xf32>
    %c0_1 = arith.constant 0 : index
    %c0_2 = arith.constant 0 : index
    %1 = vector.load %arg2[%c0_1, %c0_2] : memref<16x32xf32, #tpu.memory_space<vmem>>, vector<16x32xf32>
    %c0_3 = arith.constant 0 : index
    %c0_4 = arith.constant 0 : index
    %2 = vector.load %arg3[%c0_3, %c0_4] : memref<1x32xf32, #tpu.memory_space<vmem>>, vector<1x32xf32>
    %cst = arith.constant dense<0.000000e+00> : vector<128x32xf32>
    %3 = tpu.matmul %0, %1, %cst {dimension_numbers = #tpu.dot_dimension_numbers<[1], [0], [0], [1], [0, 0, 1, 1], [], []>} : vector<128x16xf32>, vector<16x32xf32>, vector<128x32xf32> -> vector<128x32xf32>
    %4 = vector.broadcast %2 : vector<1x32xf32> to vector<128x32xf32>
    %5 = arith.addf %3, %4 : vector<128x32xf32>
    %cst_5 = arith.constant dense<0xFF800000> : vector<128xf32>
    %6 = vector.multi_reduction <maximumf>, %5, %cst_5 [1] : vector<128x32xf32> to vector<128xf32>
    %7 = vector.shape_cast %6 : vector<128xf32> to vector<128x1xf32>
    %8 = vector.broadcast %7 : vector<128x1xf32> to vector<128x32xf32>
    %9 = arith.subf %5, %8 : vector<128x32xf32>
    %10 = math.exp %9 : vector<128x32xf32>
    %cst_6 = arith.constant dense<0.000000e+00> : vector<128xf32>
    %11 = vector.multi_reduction <add>, %10, %cst_6 [1] : vector<128x32xf32> to vector<128xf32>
    %12 = vector.shape_cast %11 : vector<128xf32> to vector<128x1xf32>
    %13 = tpu.reciprocal %12 {approx = true} : vector<128x1xf32> -> vector<128x1xf32>
    %14 = vector.broadcast %13 : vector<128x1xf32> to vector<128x32xf32>
    %15 = arith.mulf %10, %14 : vector<128x32xf32>
    %c0_7 = arith.constant 0 : index
    %c0_8 = arith.constant 0 : index
    %16 = vector.load %arg4[%c0_7, %c0_8] : memref<32x32xf32, #tpu.memory_space<vmem>>, vector<32x32xf32>
    %c0_9 = arith.constant 0 : index
    %c0_10 = arith.constant 0 : index
    %17 = vector.load %arg5[%c0_9, %c0_10] : memref<1x32xf32, #tpu.memory_space<vmem>>, vector<1x32xf32>
    %cst_11 = arith.constant dense<0.000000e+00> : vector<128x32xf32>
    %18 = tpu.matmul %15, %16, %cst_11 {dimension_numbers = #tpu.dot_dimension_numbers<[1], [0], [0], [1], [0, 0, 1, 1], [], []>} : vector<128x32xf32>, vector<32x32xf32>, vector<128x32xf32> -> vector<128x32xf32>
    %19 = vector.broadcast %17 : vector<1x32xf32> to vector<128x32xf32>
    %20 = arith.addf %18, %19 : vector<128x32xf32>
    %cst_12 = arith.constant dense<0xFF800000> : vector<128xf32>
    %21 = vector.multi_reduction <maximumf>, %20, %cst_12 [1] : vector<128x32xf32> to vector<128xf32>
    %22 = vector.shape_cast %21 : vector<128xf32> to vector<128x1xf32>
    %23 = vector.broadcast %22 : vector<128x1xf32> to vector<128x32xf32>
    %24 = arith.subf %20, %23 : vector<128x32xf32>
    %25 = math.exp %24 : vector<128x32xf32>
    %cst_13 = arith.constant dense<0.000000e+00> : vector<128xf32>
    %26 = vector.multi_reduction <add>, %25, %cst_13 [1] : vector<128x32xf32> to vector<128xf32>
    %27 = vector.shape_cast %26 : vector<128xf32> to vector<128x1xf32>
    %28 = tpu.reciprocal %27 {approx = true} : vector<128x1xf32> -> vector<128x1xf32>
    %29 = vector.broadcast %28 : vector<128x1xf32> to vector<128x32xf32>
    %30 = arith.mulf %25, %29 : vector<128x32xf32>
    %c0_14 = arith.constant 0 : index
    %c0_15 = arith.constant 0 : index
    %31 = vector.load %arg6[%c0_14, %c0_15] : memref<1x32xf32, #tpu.memory_space<vmem>>, vector<1x32xf32>
    %c0_16 = arith.constant 0 : index
    %c0_17 = arith.constant 0 : index
    %32 = vector.load %arg7[%c0_16, %c0_17] : memref<1x1xf32, #tpu.memory_space<vmem>>, vector<1x1xf32>
    %cst_18 = arith.constant dense<0.000000e+00> : vector<1x128xf32>
    %33 = tpu.matmul %31, %30, %cst_18 {dimension_numbers = #tpu.dot_dimension_numbers<[1], [1], [0], [0], [0, 0, 1, 0], [], []>} : vector<1x32xf32>, vector<128x32xf32>, vector<1x128xf32> -> vector<1x128xf32>
    %34 = vector.broadcast %32 : vector<1x1xf32> to vector<1x128xf32>
    %35 = arith.addf %33, %34 : vector<1x128xf32>
    %c0_19 = arith.constant 0 : index
    %c0_20 = arith.constant 0 : index
    %36 = vector.load %arg8[%c0_19, %c0_20] : memref<1x128xf32, #tpu.memory_space<vmem>>, vector<1x128xf32>
    tpu.vector_store %arg8[%c0_19, %c0_20], %35 {strides = array<i32>} : memref<1x128xf32, #tpu.memory_space<vmem>>, vector<1x128xf32>,
    return
  }
  func.func @transform_0(%arg0: i32) -> (i32, i32) {
    %c0_i32 = arith.constant 0 : i32
    %c0_i32_0 = arith.constant 0 : i32
    return %arg0, %c0_i32 : i32, i32
  }
  func.func @transform_1(%arg0: i32) -> (i32, i32) {
    %c0_i32 = arith.constant 0 : i32
    %c0_i32_0 = arith.constant 0 : i32
    %c0_i32_1 = arith.constant 0 : i32
    return %c0_i32, %c0_i32_0 : i32, i32
  }
  func.func @transform_2(%arg0: i32) -> (i32, i32) {
    %c0_i32 = arith.constant 0 : i32
    %c0_i32_0 = arith.constant 0 : i32
    %c0_i32_1 = arith.constant 0 : i32
    return %c0_i32, %c0_i32_0 : i32, i32
  }
  func.func @transform_3(%arg0: i32) -> (i32, i32) {
    %c0_i32 = arith.constant 0 : i32
    %c0_i32_0 = arith.constant 0 : i32
    %c0_i32_1 = arith.constant 0 : i32
    return %c0_i32, %c0_i32_0 : i32, i32
  }
  func.func @transform_4(%arg0: i32) -> (i32, i32) {
    %c0_i32 = arith.constant 0 : i32
    %c0_i32_0 = arith.constant 0 : i32
    %c0_i32_1 = arith.constant 0 : i32
    return %c0_i32, %c0_i32_0 : i32, i32
  }
  func.func @transform_5(%arg0: i32) -> (i32, i32) {
    %c0_i32 = arith.constant 0 : i32
    %c0_i32_0 = arith.constant 0 : i32
    %c0_i32_1 = arith.constant 0 : i32
    return %c0_i32, %c0_i32_0 : i32, i32
  }
  func.func @transform_6(%arg0: i32) -> (i32, i32) {
    %c0_i32 = arith.constant 0 : i32
    %c0_i32_0 = arith.constant 0 : i32
    %c0_i32_1 = arith.constant 0 : i32
    return %c0_i32, %c0_i32_0 : i32, i32
  }
  func.func @transform_7(%arg0: i32) -> (i32, i32) {
    %c0_i32 = arith.constant 0 : i32
    %c0_i32_0 = arith.constant 0 : i32
    return %c0_i32, %arg0 : i32, i32
  }
}

</mosaic_0001>

<llo_original>
// kernel: custom_critic_forward.1
$region0: #{custom_critic_forward.1}
  #allocation0 [shape = 'u32[]', space=smem, size = 0x4, offset = 0x4, fixed_abs, tag = 'smem constant byte address 0x4 - core index']
  #allocation1 [shape = 'u32[72,128]{1,0:T(1,128)}', space=vmem, size = 0x9000, scoped, tag = 'internal scratch']
  #allocation2 [shape = 'f32[1,1]{1,0:T(1,128)S(1)}', space=vmem, size = 0x200, scoped, tag = 'scoped memory for custom_critic_forward.1']
  %s0 = inlined_call_operand.vmem [shape: f32[200,16], index: 0, kind: input, shape index: {}]
  %s1 = inlined_call_operand.vmem [shape: f32[16,32], index: 1, kind: input, shape index: {}]
  %s2 = inlined_call_operand.vmem [shape: f32[1,32], index: 2, kind: input, shape index: {}]
  %s3 = inlined_call_operand.vmem [shape: f32[32,32], index: 3, kind: input, shape index: {}]
  %s4 = inlined_call_operand.vmem [shape: f32[1,32], index: 4, kind: input, shape index: {}]
  %s5 = inlined_call_operand.vmem [shape: f32[1,32], index: 5, kind: input, shape index: {}]
  %s6 = inlined_call_operand.<no memory space> [shape: f32[1,1], index: 6, kind: input, shape index: {}]
  %s7 = inlined_call_operand.hbm [shape: f32[1,256], index: 7, kind: output, shape index: {}]
  %s8 = sld [smem:[#allocation0]]
  $region61: #{custom_critic_forward.1} parent=0
    _
  %s10 = ssub.s32 1, %s8
  %s11 = scalar_select 0, %s10, %s8
  %v12 = vstv %s6
  %13 = vst [vmem:[#allocation2] sm:$0x1] %v12
  $region1: #{custom_critic_forward.1} parent=0
    #allocation3 [shape = 'u8[1024]{0}', space=vmem, size = 0x400, scoped, tag = 'output window, operand 0']
    #allocation4 [shape = 's32[2]{0}', space=sflag, size = 0x8, scoped, tag = 'scoped memory for custom_critic_forward.1']
    %14 = vsyncpa [#allocation4], 0
    %s15 = scalar_lea.sflag [#allocation4], 1
    %16 = vsyncpa %s15, 0
    loop: start=0, step=1, limit=4
    $region2: #{custom_critic_forward.1} parent=1 // loop_pre_header
      _
    $region3: #{custom_critic_forward.1} parent=1 // loop_header
      %s18 = sphi 0, %s22
      %p19 = scmp.ge.s32.totalorder %s18, 4
      %s28 = sphi 0, %s30
      %s31 = sphi 0, %s28
      %s32 = sphi 0, %s31
      %s48 = sphi 0, %s32
      %s52 = sphi 0, %s52
      %s54 = sphi 0, %s52
      %s55 = sphi 0, %s54
      %s69 = sphi 0, %s55
      %s73 = sphi 0, %s73
      %s75 = sphi 0, %s73
      %s76 = sphi 0, %s75
      %s90 = sphi 0, %s76
      %s94 = sphi 0, %s94
      %s96 = sphi 0, %s94
      %s97 = sphi 0, %s96
      %s111 = sphi 0, %s97
      %s115 = sphi 0, %s115
      %s117 = sphi 0, %s115
      %s118 = sphi 0, %s117
      %s132 = sphi 0, %s118
      %s136 = sphi 0, %s136
      %s138 = sphi 0, %s136
      %s139 = sphi 0, %s138
      %s153 = sphi 0, %s139
      %s157 = sphi 0, %s157
      %s159 = sphi 0, %s157
      %s160 = sphi 0, %s159
      %s174 = sphi 0, %s160
      %s180 = sphi 0, %s182
      %s183 = sphi 0, %s180
      %s184 = sphi 0, %s183
      %s200 = sphi 0, %s184
    $region4: #{custom_critic_forward.1} parent=1 // loop_header_branch
      %21 = sbr.rel (%p19) target = $region8
    $region5: #{custom_critic_forward.1} parent=1 // loop_body
      %s23 = ssub.s32 %s18, 1
      %s24 = ssub.s32 %s18, 2
      %s25 = sadd.s32 %s18, 1
      %s26 = ssub.s32 %s18, %s25
      %p27 = scmp.eq.s32.totalorder %s26, 0
      %s29 = sadd.s32 %s28, 1
      %s30 = scalar_select %p27, %s28, %s29
      %p33 = pneg %p27
      %p34 = scmp.eq.s32.totalorder %s18, 1
      %p35 = por %p33, %p34
      %p36 = scmp.ne.s32.totalorder %s28, %s31
      %p37 = scmp.eq.s32.totalorder %s18, 0
      %p38 = por %p36, %p37
      %p39 = scmp.ne.s32.totalorder %s28, %s31
      %p40 = scmp.eq.s32.totalorder %s23, 1
      %p41 = por %p39, %p40
      %p42 = scmp.ne.s32.totalorder %s31, %s32
      %p43 = scmp.eq.s32.totalorder %s23, 0
      %p44 = por %p42, %p43
      %p45 = scmp.ne.s32.totalorder %s31, %s32
      %p46 = scmp.eq.s32.totalorder %s24, 1
      %p47 = por %p45, %p46
      %p49 = scmp.ne.s32.totalorder %s32, %s48
      %p50 = scmp.eq.s32.totalorder %s24, 0
      %p51 = por %p49, %p50
      %s53 = sadd.s32 %s52, 1
      %p56 = scmp.eq.s32.totalorder %s18, 1
      %p57 = scmp.ne.s32.totalorder %s52, %s54
      %p58 = scmp.eq.s32.totalorder %s18, 0
      %p59 = por %p57, %p58
      %p60 = scmp.ne.s32.totalorder %s52, %s54
      %p61 = scmp.eq.s32.totalorder %s23, 1
      %p62 = por %p60, %p61
      %p63 = scmp.ne.s32.totalorder %s54, %s55
      %p64 = scmp.eq.s32.totalorder %s23, 0
      %p65 = por %p63, %p64
      %p66 = scmp.ne.s32.totalorder %s54, %s55
      %p67 = scmp.eq.s32.totalorder %s24, 1
      %p68 = por %p66, %p67
      %p70 = scmp.ne.s32.totalorder %s55, %s69
      %p71 = scmp.eq.s32.totalorder %s24, 0
      %p72 = por %p70, %p71
      %s74 = sadd.s32 %s73, 1
      %p77 = scmp.eq.s32.totalorder %s18, 1
      %p78 = scmp.ne.s32.totalorder %s73, %s75
      %p79 = scmp.eq.s32.totalorder %s18, 0
      %p80 = por %p78, %p79
      %p81 = scmp.ne.s32.totalorder %s73, %s75
      %p82 = scmp.eq.s32.totalorder %s23, 1
      %p83 = por %p81, %p82
      %p84 = scmp.ne.s32.totalorder %s75, %s76
      %p85 = scmp.eq.s32.totalorder %s23, 0
      %p86 = por %p84, %p85
      %p87 = scmp.ne.s32.totalorder %s75, %s76
      %p88 = scmp.eq.s32.totalorder %s24, 1
      %p89 = por %p87, %p88
      %p91 = scmp.ne.s32.totalorder %s76, %s90
      %p92 = scmp.eq.s32.totalorder %s24, 0
      %p93 = por %p91, %p92
      %s95 = sadd.s32 %s94, 1
      %p98 = scmp.eq.s32.totalorder %s18, 1
      %p99 = scmp.ne.s32.totalorder %s94, %s96
      %p100 = scmp.eq.s32.totalorder %s18, 0
      %p101 = por %p99, %p100
      %p102 = scmp.ne.s32.totalorder %s94, %s96
      %p103 = scmp.eq.s32.totalorder %s23, 1
      %p104 = por %p102, %p103
      %p105 = scmp.ne.s32.totalorder %s96, %s97
      %p106 = scmp.eq.s32.totalorder %s23, 0
      %p107 = por %p105, %p106
      %p108 = scmp.ne.s32.totalorder %s96, %s97
      %p109 = scmp.eq.s32.totalorder %s24, 1
      %p110 = por %p108, %p109
      %p112 = scmp.ne.s32.totalorder %s97, %s111
      %p113 = scmp.eq.s32.totalorder %s24, 0
      %p114 = por %p112, %p113
      %s116 = sadd.s32 %s115, 1
      %p119 = scmp.eq.s32.totalorder %s18, 1
      %p120 = scmp.ne.s32.totalorder %s115, %s117
      %p121 = scmp.eq.s32.totalorder %s18, 0
      %p122 = por %p120, %p121
      %p123 = scmp.ne.s32.totalorder %s115, %s117
      %p124 = scmp.eq.s32.totalorder %s23, 1
      %p125 = por %p123, %p124
      %p126 = scmp.ne.s32.totalorder %s117, %s118
      %p127 = scmp.eq.s32.totalorder %s23, 0
      %p128 = por %p126, %p127
      %p129 = scmp.ne.s32.totalorder %s117, %s118
      %p130 = scmp.eq.s32.totalorder %s24, 1
      %p131 = por %p129, %p130
      %p133 = scmp.ne.s32.totalorder %s118, %s132
      %p134 = scmp.eq.s32.totalorder %s24, 0
      %p135 = por %p133, %p134
      %s137 = sadd.s32 %s136, 1
      %p140 = scmp.eq.s32.totalorder %s18, 1
      %p141 = scmp.ne.s32.totalorder %s136, %s138
      %p142 = scmp.eq.s32.totalorder %s18, 0
      %p143 = por %p141, %p142
      %p144 = scmp.ne.s32.totalorder %s136, %s138
      %p145 = scmp.eq.s32.totalorder %s23, 1
      %p146 = por %p144, %p145
      %p147 = scmp.ne.s32.totalorder %s138, %s139
      %p148 = scmp.eq.s32.totalorder %s23, 0
      %p149 = por %p147, %p148
      %p150 = scmp.ne.s32.totalorder %s138, %s139
      %p151 = scmp.eq.s32.totalorder %s24, 1
      %p152 = por %p150, %p151
      %p154 = scmp.ne.s32.totalorder %s139, %s153
      %p155 = scmp.eq.s32.totalorder %s24, 0
      %p156 = por %p154, %p155
      %s158 = sadd.s32 %s157, 1
      %p161 = scmp.eq.s32.totalorder %s18, 1
      %p162 = scmp.ne.s32.totalorder %s157, %s159
      %p163 = scmp.eq.s32.totalorder %s18, 0
      %p164 = por %p162, %p163
      %p165 = scmp.ne.s32.totalorder %s157, %s159
      %p166 = scmp.eq.s32.totalorder %s23, 1
      %p167 = por %p165, %p166
      %p168 = scmp.ne.s32.totalorder %s159, %s160
      %p169 = scmp.eq.s32.totalorder %s23, 0
      %p170 = por %p168, %p169
      %p171 = scmp.ne.s32.totalorder %s159, %s160
      %p172 = scmp.eq.s32.totalorder %s24, 1
      %p173 = por %p171, %p172
      %p175 = scmp.ne.s32.totalorder %s160, %s174
      %p176 = scmp.eq.s32.totalorder %s24, 0
      %p177 = por %p175, %p176
      %s178 = ssub.s32 %s18, %s25
      %p179 = scmp.eq.s32.totalorder %s178, 0
      %s181 = sadd.s32 %s180, 1
      %s182 = scalar_select %p179, %s180, %s181
      %p185 = pneg %p179
      %p186 = scmp.eq.s32.totalorder %s18, 1
      %p187 = por %p185, %p186
      %p188 = scmp.ne.s32.totalorder %s180, %s183
      %p189 = scmp.eq.s32.totalorder %s18, 0
      %p190 = por %p188, %p189
      %p191 = scmp.ne.s32.totalorder %s180, %s183
      %p192 = scmp.eq.s32.totalorder %s23, 1
      %p193 = por %p191, %p192
      %p194 = scmp.ne.s32.totalorder %s183, %s184
      %p195 = scmp.eq.s32.totalorder %s23, 0
      %p196 = por %p194, %p195
      %p197 = scmp.ne.s32.totalorder %s183, %s184
      %p198 = scmp.eq.s32.totalorder %s24, 1
      %p199 = por %p197, %p198
      %p201 = scmp.ne.s32.totalorder %s184, %s200
      %p202 = scmp.eq.s32.totalorder %s24, 0
      %p203 = por %p201, %p202
      %p204 = scmp.le.s32.totalorder 1, %s18
      %p205 = scmp.lt.s32.totalorder %s18, 3
      %p206 = pnand %p204, %p205
      %p207 = pneg %p206
      // Predicated region
      $region9: #{custom_critic_forward.1} parent=5 // pred_check
        _
      $region10: #{custom_critic_forward.1} parent=5 // pred_check_branch
        %209 = sbr.rel (%p206) target = $region12
      $region11: #{custom_critic_forward.1} parent=5 // pred_region
        %s210 = ssub.s32 %s18, 1
        // Predicated region
        $region13: #{custom_critic_forward.1} parent=11 // pred_check
          %p211 = pneg %p65
        $region14: #{custom_critic_forward.1} parent=11 // pred_check_branch
          %213 = sbr.rel (%p211) target = $region16
        $region15: #{custom_critic_forward.1} parent=11 // pred_region
          _
        $region16: #{custom_critic_forward.1} parent=11 // pred_fallthru
          _
        // Predicated region
        $region17: #{custom_critic_forward.1} parent=11 // pred_check
          %p214 = pneg %p86
        $region18: #{custom_critic_forward.1} parent=11 // pred_check_branch
          %216 = sbr.rel (%p214) target = $region20
        $region19: #{custom_critic_forward.1} parent=11 // pred_region
          _
        $region20: #{custom_critic_forward.1} parent=11 // pred_fallthru
          _
        // Predicated region
        $region21: #{custom_critic_forward.1} parent=11 // pred_check
          %p217 = pneg %p107
        $region22: #{custom_critic_forward.1} parent=11 // pred_check_branch
          %219 = sbr.rel (%p217) target = $region24
        $region23: #{custom_critic_forward.1} parent=11 // pred_region
          _
        $region24: #{custom_critic_forward.1} parent=11 // pred_fallthru
          _
        // Predicated region
        $region25: #{custom_critic_forward.1} parent=11 // pred_check
          %p220 = pneg %p128
        $region26: #{custom_critic_forward.1} parent=11 // pred_check_branch
          %222 = sbr.rel (%p220) target = $region28
        $region27: #{custom_critic_forward.1} parent=11 // pred_region
          _
        $region28: #{custom_critic_forward.1} parent=11 // pred_fallthru
          _
        // Predicated region
        $region29: #{custom_critic_forward.1} parent=11 // pred_check
          %p223 = pneg %p149
        $region30: #{custom_critic_forward.1} parent=11 // pred_check_branch
          %225 = sbr.rel (%p223) target = $region32
        $region31: #{custom_critic_forward.1} parent=11 // pred_region
          _
        $region32: #{custom_critic_forward.1} parent=11 // pred_fallthru
          _
        // Predicated region
        $region33: #{custom_critic_forward.1} parent=11 // pred_check
          %p226 = pneg %p170
        $region34: #{custom_critic_forward.1} parent=11 // pred_check_branch
          %228 = sbr.rel (%p226) target = $region36
        $region35: #{custom_critic_forward.1} parent=11 // pred_region
          _
        $region36: #{custom_critic_forward.1} parent=11 // pred_fallthru
          _
      $region12: #{custom_critic_forward.1} parent=5 // pred_fallthru
        _
      %p229 = scmp.lt.s32.totalorder %s18, 2
      // Predicated region
      $region37: #{custom_critic_forward.1} parent=5 // pred_check
        %p230 = pneg %p229
      $region38: #{custom_critic_forward.1} parent=5 // pred_check_branch
        %232 = sbr.rel (%p230) target = $region40
      $region39: #{custom_critic_forward.1} parent=5 // pred_region
        // Predicated region
        $region41: #{custom_critic_forward.1} parent=39 // pred_check
          %p233 = pneg %p38
        $region42: #{custom_critic_forward.1} parent=39 // pred_check_branch
          %235 = sbr.rel (%p233) target = $region44
        $region43: #{custom_critic_forward.1} parent=39 // pred_region
          %s236 = smul.u32 16, %s18
          %s237 = ssub.s32 25, %s236
          %p238 = scmp.lt.s32.totalorder %s237, 16
          %s239 = scalar_select %p238, %s237, 16
          %s240 = smul.u32 8, %s239
          %p241 = scmp.lt.s32.totalorder %s236, 24
          %s242 = scalar_select %p241, %s236, 24
          %s243 = smul.addr %s242, 8
          %s244 = scalar_lea.vmem %s0, %s243
          %s245 = smul.u32 16, %s18
          %s246 = ssub.s32 25, %s245
          %p247 = scmp.lt.s32.totalorder %s246, 16
          %s248 = scalar_select %p247, %s246, 16
          %s249 = smul.u32 8, %s248
        $region44: #{custom_critic_forward.1} parent=39 // pred_fallthru
          _
      $region40: #{custom_critic_forward.1} parent=5 // pred_fallthru
        _
      %p250 = scmp.le.s32.totalorder 1, %s18
      %p251 = scmp.lt.s32.totalorder %s18, 3
      %p252 = pnand %p250, %p251
      %p253 = pneg %p252
      // Predicated region
      $region45: #{custom_critic_forward.1} parent=5 // pred_check
        _
      $region46: #{custom_critic_forward.1} parent=5 // pred_check_branch
        %255 = sbr.rel (%p252) target = $region48
      $region47: #{custom_critic_forward.1} parent=5 // pred_region
        %s256 = ssub.s32 %s18, 1
        %s257 = smul.u32 16, %s23
        %s258 = ssub.s32 25, %s257
        %p259 = scmp.lt.s32.totalorder %s258, 16
        %s260 = scalar_select %p259, %s258, 16
        %s261 = smul.u32 8, %s260
        %p262 = scmp.lt.s32.totalorder %s257, 24
        %s263 = scalar_select %p262, %s257, 24
        %s264 = smul.addr %s263, 8
        %s265 = scalar_lea.vmem %s0, %s264
        %p266 = pneg %p44
        %p267 = pneg %p41
        %p268 = pneg %p65
        %p269 = pneg %p62
        %p270 = pneg %p86
        %p271 = pneg %p83
        %p272 = pneg %p107
        %p273 = pneg %p104
        %p274 = pneg %p128
        %p275 = pneg %p125
        %p276 = pneg %p149
        %p277 = pneg %p146
        %p278 = pneg %p170
        %p279 = pneg %p167
        %p280 = pneg %p196
        %p281 = pneg %p193
        %s282 = sand.u32 %s183, 1
        %s283 = scalar_lea.sflag [#allocation4], %s282
        %s284 = sand.u32 %s183, 1
        %s285 = scalar_lea.vmem [#allocation3], %s284
        %s286 = smul.u32 16, %s23
        %s287 = ssub.s32 25, %s286
        %p288 = scmp.lt.s32.totalorder %s287, 16
        %s289 = scalar_select %p288, %s287, 16
        %s290 = smul.u32 8, %s289
        %p291 = scmp.lt.s32.totalorder %s286, 24
        %s292 = scalar_select %p291, %s286, 24
        %s293 = smul.addr %s292, 8
        %s294 = scalar_lea.vmem %s0, %s293
        %s295 = smul.u32 16, %s23
        %s296 = ssub.s32 25, %s295
        %p297 = scmp.lt.s32.totalorder %s296, 16
        %s298 = scalar_select %p297, %s296, 16
        %s299 = smul.u32 8, %s298
        %v300 = vld [vmem:[%s294] sm:$0xff]
        %v301 = vld [vmem:[%s294 + $0x8] sm:$0xff]
        %v302 = vld [vmem:[%s294 + $0x10] sm:$0xff]
        %v303 = vld [vmem:[%s294 + $0x18] sm:$0xff]
        %v304 = vld [vmem:[%s294 + $0x20] sm:$0xff]
        %v305 = vld [vmem:[%s294 + $0x28] sm:$0xff]
        %v306 = vld [vmem:[%s294 + $0x30] sm:$0xff]
        %v307 = vld [vmem:[%s294 + $0x38] sm:$0xff]
        %v308 = vld [vmem:[%s294 + $0x40] sm:$0xff]
        %v309 = vld [vmem:[%s294 + $0x48] sm:$0xff]
        %v310 = vld [vmem:[%s294 + $0x50] sm:$0xff]
        %v311 = vld [vmem:[%s294 + $0x58] sm:$0xff]
        %v312 = vld [vmem:[%s294 + $0x60] sm:$0xff]
        %v313 = vld [vmem:[%s294 + $0x68] sm:$0xff]
        %v314 = vld [vmem:[%s294 + $0x70] sm:$0xff]
        %v315 = vld [vmem:[%s294 + $0x78] sm:$0xff]
        %v316 = vld [vmem:[%s1] sm:$0xff]
        %v317 = vld [vmem:[%s1 + $0x8] sm:$0xff]
        %v318 = vld [vmem:[%s2] sm:$0x1]
        %v320 = vperm.slane %v318, 0
        %vm322 = vcmask 130048
        %v324 = vsel %vm322, %v300, 0
        %v327 = vsel %vm322, %v301, 0
        %v330 = vsel %vm322, %v302, 0
        %v333 = vsel %vm322, %v303, 0
        %v336 = vsel %vm322, %v304, 0
        %v339 = vsel %vm322, %v305, 0
        %v342 = vsel %vm322, %v306, 0
        %v345 = vsel %vm322, %v307, 0
        %v348 = vsel %vm322, %v308, 0
        %v351 = vsel %vm322, %v309, 0
        %v354 = vsel %vm322, %v310, 0
        %v357 = vsel %vm322, %v311, 0
        %v360 = vsel %vm322, %v312, 0
        %v363 = vsel %vm322, %v313, 0
        %v366 = vsel %vm322, %v314, 0
        %v369 = vsel %vm322, %v315, 0
        %371 = vmatpush.msra.mxu0 0.0
        %372 = vmatpush.msra.mxu0 0.0
        %373 = vmatpush.msra.mxu0 0.0
        %374 = vmatpush.msra.mxu0 0.0
        %375 = vmatpush.msra.mxu0 0.0
        %376 = vmatpush.msra.mxu0 0.0
        %377 = vmatpush.msra.mxu0 0.0
        %378 = vmatpush.msra.mxu0 0.0
        %379 = vmatpush.msra.mxu0 0.0
        %380 = vmatpush.msra.mxu0 0.0
        %381 = vmatpush.msra.mxu0 0.0
        %382 = vmatpush.msra.mxu0 0.0
        %383 = vmatpush.msra.mxu0 0.0
        %384 = vmatpush.msra.mxu0 0.0
        %385 = vmatpush.msra.mxu0 %v317
        %386 = vmatpush.msra.mxu0 %v316
        %387 = vmatmul.f32.gmra.mxu0 %v324
        %v388 = vpop.f32.mrf.mxu0
        %v389 = vadd.f32 %v320, %v388
        %390 = vmatmul.f32.gmra.mxu0 %v327
        %v391 = vpop.f32.mrf.mxu0
        %v392 = vadd.f32 %v320, %v391
        %393 = vmatmul.f32.gmra.mxu0 %v330
        %v394 = vpop.f32.mrf.mxu0
        %v395 = vadd.f32 %v320, %v394
        %396 = vmatmul.f32.gmra.mxu0 %v333
        %v397 = vpop.f32.mrf.mxu0
        %v398 = vadd.f32 %v320, %v397
        %399 = vmatmul.f32.gmra.mxu0 %v336
        %v400 = vpop.f32.mrf.mxu0
        %v401 = vadd.f32 %v320, %v400
        %402 = vmatmul.f32.gmra.mxu0 %v339
        %v403 = vpop.f32.mrf.mxu0
        %v404 = vadd.f32 %v320, %v403
        %405 = vmatmul.f32.gmra.mxu0 %v342
        %v406 = vpop.f32.mrf.mxu0
        %v407 = vadd.f32 %v320, %v406
        %408 = vmatmul.f32.gmra.mxu0 %v345
        %v409 = vpop.f32.mrf.mxu0
        %v410 = vadd.f32 %v320, %v409
        %411 = vmatmul.f32.gmra.mxu0 %v348
        %v412 = vpop.f32.mrf.mxu0
        %v413 = vadd.f32 %v320, %v412
        %414 = vmatmul.f32.gmra.mxu0 %v351
        %v415 = vpop.f32.mrf.mxu0
        %v416 = vadd.f32 %v320, %v415
        %417 = vmatmul.f32.gmra.mxu0 %v354
        %v418 = vpop.f32.mrf.mxu0
        %v419 = vadd.f32 %v320, %v418
        %420 = vmatmul.f32.gmra.mxu0 %v357
        %v421 = vpop.f32.mrf.mxu0
        %v422 = vadd.f32 %v320, %v421
        %423 = vmatmul.f32.gmra.mxu0 %v360
        %v424 = vpop.f32.mrf.mxu0
        %v425 = vadd.f32 %v320, %v424
        %426 = vmatmul.f32.gmra.mxu0 %v363
        %v427 = vpop.f32.mrf.mxu0
        %v428 = vadd.f32 %v320, %v427
        %429 = vmatmul.f32.gmra.mxu0 %v366
        %v430 = vpop.f32.mrf.mxu0
        %v431 = vadd.f32 %v320, %v430
        %432 = vmatmul.f32.gmra.mxu0 %v369
        %v433 = vpop.f32.mrf.mxu0
        %v434 = vadd.f32 %v320, %v433
        %435 = vdwg.mxu0
        %vm436 = vcmask 261120
        %v437 = vsel %vm436, %v389, -inf
        %438 = vmax.xlane.f32.xlu0 %v437
        %v439 = vpop.xlane.xlu0 %438
        %v440 = vsel %vm436, %v392, -inf
        %441 = vmax.xlane.f32.xlu0 %v440
        %v442 = vpop.xlane.xlu0 %441
        %v443 = vsel %vm436, %v395, -inf
        %444 = vmax.xlane.f32.xlu0 %v443
        %v445 = vpop.xlane.xlu0 %444
        %v446 = vsel %vm436, %v398, -inf
        %447 = vmax.xlane.f32.xlu0 %v446
        %v448 = vpop.xlane.xlu0 %447
        %v449 = vsel %vm436, %v401, -inf
        %450 = vmax.xlane.f32.xlu0 %v449
        %v451 = vpop.xlane.xlu0 %450
        %v452 = vsel %vm436, %v404, -inf
        %453 = vmax.xlane.f32.xlu0 %v452
        %v454 = vpop.xlane.xlu0 %453
        %v455 = vsel %vm436, %v407, -inf
        %456 = vmax.xlane.f32.xlu0 %v455
        %v457 = vpop.xlane.xlu0 %456
        %v458 = vsel %vm436, %v410, -inf
        %459 = vmax.xlane.f32.xlu0 %v458
        %v460 = vpop.xlane.xlu0 %459
        %v461 = vsel %vm436, %v413, -inf
        %462 = vmax.xlane.f32.xlu0 %v461
        %v463 = vpop.xlane.xlu0 %462
        %v464 = vsel %vm436, %v416, -inf
        %465 = vmax.xlane.f32.xlu0 %v464
        %v466 = vpop.xlane.xlu0 %465
        %v467 = vsel %vm436, %v419, -inf
        %468 = vmax.xlane.f32.xlu0 %v467
        %v469 = vpop.xlane.xlu0 %468
        %v470 = vsel %vm436, %v422, -inf
        %471 = vmax.xlane.f32.xlu0 %v470
        %v472 = vpop.xlane.xlu0 %471
        %v473 = vsel %vm436, %v425, -inf
        %474 = vmax.xlane.f32.xlu0 %v473
        %v475 = vpop.xlane.xlu0 %474
        %v476 = vsel %vm436, %v428, -inf
        %477 = vmax.xlane.f32.xlu0 %v476
        %v478 = vpop.xlane.xlu0 %477
        %v479 = vsel %vm436, %v431, -inf
        %480 = vmax.xlane.f32.xlu0 %v479
        %v481 = vpop.xlane.xlu0 %480
        %v482 = vsel %vm436, %v434, -inf
        %483 = vmax.xlane.f32.xlu0 %v482
        %v484 = vpop.xlane.xlu0 %483
        %v485 = vsub.f32 %v389, %v439
        %v486 = vsub.f32 %v392, %v442
        %v487 = vsub.f32 %v395, %v445
        %v488 = vsub.f32 %v398, %v448
        %v489 = vsub.f32 %v401, %v451
        %v490 = vsub.f32 %v404, %v454
        %v491 = vsub.f32 %v407, %v457
        %v492 = vsub.f32 %v410, %v460
        %v493 = vsub.f32 %v413, %v463
        %v494 = vsub.f32 %v416, %v466
        %v495 = vsub.f32 %v419, %v469
        %v496 = vsub.f32 %v422, %v472
        %v497 = vsub.f32 %v425, %v475
        %v498 = vsub.f32 %v428, %v478
        %v499 = vsub.f32 %v431, %v481
        %v500 = vsub.f32 %v434, %v484
        %v501 = vmul.f32 %v485, 1.442695
        %v502 = vpow.pop %v501
        %v503 = vmul.f32 %v486, 1.442695
        %v504 = vpow.pop %v503
        %v505 = vmul.f32 %v487, 1.442695
        %v506 = vpow.pop %v505
        %v507 = vmul.f32 %v488, 1.442695
        %v508 = vpow.pop %v507
        %v509 = vmul.f32 %v489, 1.442695
        %v510 = vpow.pop %v509
        %v511 = vmul.f32 %v490, 1.442695
        %v512 = vpow.pop %v511
        %v513 = vmul.f32 %v491, 1.442695
        %v514 = vpow.pop %v513
        %v515 = vmul.f32 %v492, 1.442695
        %v516 = vpow.pop %v515
        %v517 = vmul.f32 %v493, 1.442695
        %v518 = vpow.pop %v517
        %v519 = vmul.f32 %v494, 1.442695
        %v520 = vpow.pop %v519
        %v521 = vmul.f32 %v495, 1.442695
        %v522 = vpow.pop %v521
        %v523 = vmul.f32 %v496, 1.442695
        %v524 = vpow.pop %v523
        %v525 = vmul.f32 %v497, 1.442695
        %v526 = vpow.pop %v525
        %v527 = vmul.f32 %v498, 1.442695
        %v528 = vpow.pop %v527
        %v529 = vmul.f32 %v499, 1.442695
        %v530 = vpow.pop %v529
        %v531 = vmul.f32 %v500, 1.442695
        %v532 = vpow.pop %v531
        %v533 = vsel %vm436, %v502, 0.0
        %534 = vadd.xlane.f32.xlu0 %v533
        %v535 = vpop.xlane.xlu0 %534
        %v536 = vsel %vm436, %v504, 0.0
        %537 = vadd.xlane.f32.xlu0 %v536
        %v538 = vpop.xlane.xlu0 %537
        %v539 = vsel %vm436, %v506, 0.0
        %540 = vadd.xlane.f32.xlu0 %v539
        %v541 = vpop.xlane.xlu0 %540
        %v542 = vsel %vm436, %v508, 0.0
        %543 = vadd.xlane.f32.xlu0 %v542
        %v544 = vpop.xlane.xlu0 %543
        %v545 = vsel %vm436, %v510, 0.0
        %546 = vadd.xlane.f32.xlu0 %v545
        %v547 = vpop.xlane.xlu0 %546
        %v548 = vsel %vm436, %v512, 0.0
        %549 = vadd.xlane.f32.xlu0 %v548
        %v550 = vpop.xlane.xlu0 %549
        %v551 = vsel %vm436, %v514, 0.0
        %552 = vadd.xlane.f32.xlu0 %v551
        %v553 = vpop.xlane.xlu0 %552
        %v554 = vsel %vm436, %v516, 0.0
        %555 = vadd.xlane.f32.xlu0 %v554
        %v556 = vpop.xlane.xlu0 %555
        %v557 = vsel %vm436, %v518, 0.0
        %558 = vadd.xlane.f32.xlu0 %v557
        %v559 = vpop.xlane.xlu0 %558
        %v560 = vsel %vm436, %v520, 0.0
        %561 = vadd.xlane.f32.xlu0 %v560
        %v562 = vpop.xlane.xlu0 %561
        %v563 = vsel %vm436, %v522, 0.0
        %564 = vadd.xlane.f32.xlu0 %v563
        %v565 = vpop.xlane.xlu0 %564
        %v566 = vsel %vm436, %v524, 0.0
        %567 = vadd.xlane.f32.xlu0 %v566
        %v568 = vpop.xlane.xlu0 %567
        %v569 = vsel %vm436, %v526, 0.0
        %570 = vadd.xlane.f32.xlu0 %v569
        %v571 = vpop.xlane.xlu0 %570
        %v572 = vsel %vm436, %v528, 0.0
        %573 = vadd.xlane.f32.xlu0 %v572
        %v574 = vpop.xlane.xlu0 %573
        %v575 = vsel %vm436, %v530, 0.0
        %576 = vadd.xlane.f32.xlu0 %v575
        %v577 = vpop.xlane.xlu0 %576
        %v578 = vsel %vm436, %v532, 0.0
        %579 = vadd.xlane.f32.xlu0 %v578
        %v580 = vpop.xlane.xlu0 %579
        %v581 = vrcp.pop %v535
        %v582 = vrcp.pop %v538
        %v583 = vrcp.pop %v541
        %v584 = vrcp.pop %v544
        %v585 = vrcp.pop %v547
        %v586 = vrcp.pop %v550
        %v587 = vrcp.pop %v553
        %v588 = vrcp.pop %v556
        %v589 = vrcp.pop %v559
        %v590 = vrcp.pop %v562
        %v591 = vrcp.pop %v565
        %v592 = vrcp.pop %v568
        %v593 = vrcp.pop %v571
        %v594 = vrcp.pop %v574
        %v595 = vrcp.pop %v577
        %v596 = vrcp.pop %v580
        %v597 = vmul.f32 %v502, %v581
        %v598 = vmul.f32 %v504, %v582
        %v599 = vmul.f32 %v506, %v583
        %v600 = vmul.f32 %v508, %v584
        %v601 = vmul.f32 %v510, %v585
        %v602 = vmul.f32 %v512, %v586
        %v603 = vmul.f32 %v514, %v587
        %v604 = vmul.f32 %v516, %v588
        %v605 = vmul.f32 %v518, %v589
        %v606 = vmul.f32 %v520, %v590
        %v607 = vmul.f32 %v522, %v591
        %v608 = vmul.f32 %v524, %v592
        %v609 = vmul.f32 %v526, %v593
        %v610 = vmul.f32 %v528, %v594
        %v611 = vmul.f32 %v530, %v595
        %v612 = vmul.f32 %v532, %v596
        %v613 = vld [vmem:[%s3] sm:$0xff]
        %v614 = vld [vmem:[%s3 + $0x8] sm:$0xff]
        %v615 = vld [vmem:[%s3 + $0x10] sm:$0xff]
        %v616 = vld [vmem:[%s3 + $0x18] sm:$0xff]
        %v617 = vld [vmem:[%s4] sm:$0x1]
        %v619 = vperm.slane %v617, 0
        %v622 = vsel %vm436, %v597, 0
        %v625 = vsel %vm436, %v598, 0
        %v628 = vsel %vm436, %v599, 0
        %v631 = vsel %vm436, %v600, 0
        %v634 = vsel %vm436, %v601, 0
        %v637 = vsel %vm436, %v602, 0
        %v640 = vsel %vm436, %v603, 0
        %v643 = vsel %vm436, %v604, 0
        %v646 = vsel %vm436, %v605, 0
        %v649 = vsel %vm436, %v606, 0
        %v652 = vsel %vm436, %v607, 0
        %v655 = vsel %vm436, %v608, 0
        %v658 = vsel %vm436, %v609, 0
        %v661 = vsel %vm436, %v610, 0
        %v664 = vsel %vm436, %v611, 0
        %v667 = vsel %vm436, %v612, 0
        %669 = vmatpush.msra.mxu0 0.0
        %670 = vmatpush.msra.mxu0 0.0
        %671 = vmatpush.msra.mxu0 0.0
        %672 = vmatpush.msra.mxu0 0.0
        %673 = vmatpush.msra.mxu0 0.0
        %674 = vmatpush.msra.mxu0 0.0
        %675 = vmatpush.msra.mxu0 0.0
        %676 = vmatpush.msra.mxu0 0.0
        %677 = vmatpush.msra.mxu0 0.0
        %678 = vmatpush.msra.mxu0 0.0
        %679 = vmatpush.msra.mxu0 0.0
        %680 = vmatpush.msra.mxu0 0.0
        %681 = vmatpush.msra.mxu0 %v616
        %682 = vmatpush.msra.mxu0 %v615
        %683 = vmatpush.msra.mxu0 %v614
        %684 = vmatpush.msra.mxu0 %v613
        %685 = vmatmul.f32.gmra.mxu0 %v622
        %v686 = vpop.f32.mrf.mxu0
        %v687 = vadd.f32 %v619, %v686
        %688 = vmatmul.f32.gmra.mxu0 %v625
        %v689 = vpop.f32.mrf.mxu0
        %v690 = vadd.f32 %v619, %v689
        %691 = vmatmul.f32.gmra.mxu0 %v628
        %v692 = vpop.f32.mrf.mxu0
        %v693 = vadd.f32 %v619, %v692
        %694 = vmatmul.f32.gmra.mxu0 %v631
        %v695 = vpop.f32.mrf.mxu0
        %v696 = vadd.f32 %v619, %v695
        %697 = vmatmul.f32.gmra.mxu0 %v634
        %v698 = vpop.f32.mrf.mxu0
        %v699 = vadd.f32 %v619, %v698
        %700 = vmatmul.f32.gmra.mxu0 %v637
        %v701 = vpop.f32.mrf.mxu0
        %v702 = vadd.f32 %v619, %v701
        %703 = vmatmul.f32.gmra.mxu0 %v640
        %v704 = vpop.f32.mrf.mxu0
        %v705 = vadd.f32 %v619, %v704
        %706 = vmatmul.f32.gmra.mxu0 %v643
        %v707 = vpop.f32.mrf.mxu0
        %v708 = vadd.f32 %v619, %v707
        %709 = vmatmul.f32.gmra.mxu0 %v646
        %v710 = vpop.f32.mrf.mxu0
        %v711 = vadd.f32 %v619, %v710
        %712 = vmatmul.f32.gmra.mxu0 %v649
        %v713 = vpop.f32.mrf.mxu0
        %v714 = vadd.f32 %v619, %v713
        %715 = vmatmul.f32.gmra.mxu0 %v652
        %v716 = vpop.f32.mrf.mxu0
        %v717 = vadd.f32 %v619, %v716
        %718 = vmatmul.f32.gmra.mxu0 %v655
        %v719 = vpop.f32.mrf.mxu0
        %v720 = vadd.f32 %v619, %v719
        %721 = vmatmul.f32.gmra.mxu0 %v658
        %v722 = vpop.f32.mrf.mxu0
        %v723 = vadd.f32 %v619, %v722
        %724 = vmatmul.f32.gmra.mxu0 %v661
        %v725 = vpop.f32.mrf.mxu0
        %v726 = vadd.f32 %v619, %v725
        %727 = vmatmul.f32.gmra.mxu0 %v664
        %v728 = vpop.f32.mrf.mxu0
        %v729 = vadd.f32 %v619, %v728
        %730 = vmatmul.f32.gmra.mxu0 %v667
        %v731 = vpop.f32.mrf.mxu0
        %v732 = vadd.f32 %v619, %v731
        %733 = vdwg.mxu0
        %v734 = vsel %vm436, %v687, -inf
        %735 = vmax.xlane.f32.xlu0 %v734
        %v736 = vpop.xlane.xlu0 %735
        %v737 = vsel %vm436, %v690, -inf
        %738 = vmax.xlane.f32.xlu0 %v737
        %v739 = vpop.xlane.xlu0 %738
        %v740 = vsel %vm436, %v693, -inf
        %741 = vmax.xlane.f32.xlu0 %v740
        %v742 = vpop.xlane.xlu0 %741
        %v743 = vsel %vm436, %v696, -inf
        %744 = vmax.xlane.f32.xlu0 %v743
        %v745 = vpop.xlane.xlu0 %744
        %v746 = vsel %vm436, %v699, -inf
        %747 = vmax.xlane.f32.xlu0 %v746
        %v748 = vpop.xlane.xlu0 %747
        %v749 = vsel %vm436, %v702, -inf
        %750 = vmax.xlane.f32.xlu0 %v749
        %v751 = vpop.xlane.xlu0 %750
        %v752 = vsel %vm436, %v705, -inf
        %753 = vmax.xlane.f32.xlu0 %v752
        %v754 = vpop.xlane.xlu0 %753
        %v755 = vsel %vm436, %v708, -inf
        %756 = vmax.xlane.f32.xlu0 %v755
        %v757 = vpop.xlane.xlu0 %756
        %v758 = vsel %vm436, %v711, -inf
        %759 = vmax.xlane.f32.xlu0 %v758
        %v760 = vpop.xlane.xlu0 %759
        %v761 = vsel %vm436, %v714, -inf
        %762 = vmax.xlane.f32.xlu0 %v761
        %v763 = vpop.xlane.xlu0 %762
        %v764 = vsel %vm436, %v717, -inf
        %765 = vmax.xlane.f32.xlu0 %v764
        %v766 = vpop.xlane.xlu0 %765
        %v767 = vsel %vm436, %v720, -inf
        %768 = vmax.xlane.f32.xlu0 %v767
        %v769 = vpop.xlane.xlu0 %768
        %v770 = vsel %vm436, %v723, -inf
        %771 = vmax.xlane.f32.xlu0 %v770
        %v772 = vpop.xlane.xlu0 %771
        %v773 = vsel %vm436, %v726, -inf
        %774 = vmax.xlane.f32.xlu0 %v773
        %v775 = vpop.xlane.xlu0 %774
        %v776 = vsel %vm436, %v729, -inf
        %777 = vmax.xlane.f32.xlu0 %v776
        %v778 = vpop.xlane.xlu0 %777
        %v779 = vsel %vm436, %v732, -inf
        %780 = vmax.xlane.f32.xlu0 %v779
        %v781 = vpop.xlane.xlu0 %780
        %v782 = vsub.f32 %v687, %v736
        %v783 = vsub.f32 %v690, %v739
        %v784 = vsub.f32 %v693, %v742
        %v785 = vsub.f32 %v696, %v745
        %v786 = vsub.f32 %v699, %v748
        %v787 = vsub.f32 %v702, %v751
        %v788 = vsub.f32 %v705, %v754
        %v789 = vsub.f32 %v708, %v757
        %v790 = vsub.f32 %v711, %v760
        %v791 = vsub.f32 %v714, %v763
        %v792 = vsub.f32 %v717, %v766
        %v793 = vsub.f32 %v720, %v769
        %v794 = vsub.f32 %v723, %v772
        %v795 = vsub.f32 %v726, %v775
        %v796 = vsub.f32 %v729, %v778
        %v797 = vsub.f32 %v732, %v781
        %v798 = vmul.f32 %v782, 1.442695
        %v799 = vpow.pop %v798
        %v800 = vmul.f32 %v783, 1.442695
        %v801 = vpow.pop %v800
        %v802 = vmul.f32 %v784, 1.442695
        %v803 = vpow.pop %v802
        %v804 = vmul.f32 %v785, 1.442695
        %v805 = vpow.pop %v804
        %v806 = vmul.f32 %v786, 1.442695
        %v807 = vpow.pop %v806
        %v808 = vmul.f32 %v787, 1.442695
        %v809 = vpow.pop %v808
        %v810 = vmul.f32 %v788, 1.442695
        %v811 = vpow.pop %v810
        %v812 = vmul.f32 %v789, 1.442695
        %v813 = vpow.pop %v812
        %v814 = vmul.f32 %v790, 1.442695
        %v815 = vpow.pop %v814
        %v816 = vmul.f32 %v791, 1.442695
        %v817 = vpow.pop %v816
        %v818 = vmul.f32 %v792, 1.442695
        %v819 = vpow.pop %v818
        %v820 = vmul.f32 %v793, 1.442695
        %v821 = vpow.pop %v820
        %v822 = vmul.f32 %v794, 1.442695
        %v823 = vpow.pop %v822
        %v824 = vmul.f32 %v795, 1.442695
        %v825 = vpow.pop %v824
        %v826 = vmul.f32 %v796, 1.442695
        %v827 = vpow.pop %v826
        %v828 = vmul.f32 %v797, 1.442695
        %v829 = vpow.pop %v828
        %v830 = vsel %vm436, %v799, 0.0
        %831 = vadd.xlane.f32.xlu0 %v830
        %v832 = vpop.xlane.xlu0 %831
        %v833 = vsel %vm436, %v801, 0.0
        %834 = vadd.xlane.f32.xlu0 %v833
        %v835 = vpop.xlane.xlu0 %834
        %v836 = vsel %vm436, %v803, 0.0
        %837 = vadd.xlane.f32.xlu0 %v836
        %v838 = vpop.xlane.xlu0 %837
        %v839 = vsel %vm436, %v805, 0.0
        %840 = vadd.xlane.f32.xlu0 %v839
        %v841 = vpop.xlane.xlu0 %840
        %v842 = vsel %vm436, %v807, 0.0
        %843 = vadd.xlane.f32.xlu0 %v842
        %v844 = vpop.xlane.xlu0 %843
        %v845 = vsel %vm436, %v809, 0.0
        %846 = vadd.xlane.f32.xlu0 %v845
        %v847 = vpop.xlane.xlu0 %846
        %v848 = vsel %vm436, %v811, 0.0
        %849 = vadd.xlane.f32.xlu0 %v848
        %v850 = vpop.xlane.xlu0 %849
        %v851 = vsel %vm436, %v813, 0.0
        %852 = vadd.xlane.f32.xlu0 %v851
        %v853 = vpop.xlane.xlu0 %852
        %v854 = vsel %vm436, %v815, 0.0
        %855 = vadd.xlane.f32.xlu0 %v854
        %v856 = vpop.xlane.xlu0 %855
        %v857 = vsel %vm436, %v817, 0.0
        %858 = vadd.xlane.f32.xlu0 %v857
        %v859 = vpop.xlane.xlu0 %858
        %v860 = vsel %vm436, %v819, 0.0
        %861 = vadd.xlane.f32.xlu0 %v860
        %v862 = vpop.xlane.xlu0 %861
        %v863 = vsel %vm436, %v821, 0.0
        %864 = vadd.xlane.f32.xlu0 %v863
        %v865 = vpop.xlane.xlu0 %864
        %v866 = vsel %vm436, %v823, 0.0
        %867 = vadd.xlane.f32.xlu0 %v866
        %v868 = vpop.xlane.xlu0 %867
        %v869 = vsel %vm436, %v825, 0.0
        %870 = vadd.xlane.f32.xlu0 %v869
        %v871 = vpop.xlane.xlu0 %870
        %v872 = vsel %vm436, %v827, 0.0
        %873 = vadd.xlane.f32.xlu0 %v872
        %v874 = vpop.xlane.xlu0 %873
        %v875 = vsel %vm436, %v829, 0.0
        %876 = vadd.xlane.f32.xlu0 %v875
        %v877 = vpop.xlane.xlu0 %876
        %v878 = vrcp.pop %v832
        %v879 = vrcp.pop %v835
        %v880 = vrcp.pop %v838
        %v881 = vrcp.pop %v841
        %v882 = vrcp.pop %v844
        %v883 = vrcp.pop %v847
        %v884 = vrcp.pop %v850
        %v885 = vrcp.pop %v853
        %v886 = vrcp.pop %v856
        %v887 = vrcp.pop %v859
        %v888 = vrcp.pop %v862
        %v889 = vrcp.pop %v865
        %v890 = vrcp.pop %v868
        %v891 = vrcp.pop %v871
        %v892 = vrcp.pop %v874
        %v893 = vrcp.pop %v877
        %v894 = vmul.f32 %v799, %v878
        %v895 = vmul.f32 %v801, %v879
        %v896 = vmul.f32 %v803, %v880
        %v897 = vmul.f32 %v805, %v881
        %v898 = vmul.f32 %v807, %v882
        %v899 = vmul.f32 %v809, %v883
        %v900 = vmul.f32 %v811, %v884
        %v901 = vmul.f32 %v813, %v885
        %v902 = vmul.f32 %v815, %v886
        %v903 = vmul.f32 %v817, %v887
        %v904 = vmul.f32 %v819, %v888
        %v905 = vmul.f32 %v821, %v889
        %v906 = vmul.f32 %v823, %v890
        %v907 = vmul.f32 %v825, %v891
        %v908 = vmul.f32 %v827, %v892
        %v909 = vmul.f32 %v829, %v893
        %v910 = vld [vmem:[%s5] sm:$0x1]
        %v911 = vld [vmem:[#allocation2] sm:$0x1]
        %913 = vset.pattern.permute.xlu0 0
        %914 = vperm.xlu0 %913, %v911
        %v915 = vpop.permute.xlu0 %914
        %v917 = vperm.slane %v915, 0
        %v919 = vsel %vm436, %v910, 0
        %v922 = vsel %vm436, %v894, 0
        %v925 = vsel %vm436, %v895, 0
        %v928 = vsel %vm436, %v896, 0
        %v931 = vsel %vm436, %v897, 0
        %v934 = vsel %vm436, %v898, 0
        %v937 = vsel %vm436, %v899, 0
        %v940 = vsel %vm436, %v900, 0
        %v943 = vsel %vm436, %v901, 0
        %v946 = vsel %vm436, %v902, 0
        %v949 = vsel %vm436, %v903, 0
        %v952 = vsel %vm436, %v904, 0
        %v955 = vsel %vm436, %v905, 0
        %v958 = vsel %vm436, %v906, 0
        %v961 = vsel %vm436, %v907, 0
        %v964 = vsel %vm436, %v908, 0
        %v967 = vsel %vm436, %v909, 0
        %969 = vmatpush.xpose.msra.mxu0 %v967
        %970 = vmatpush.xpose.msra.mxu0 %v964
        %971 = vmatpush.xpose.msra.mxu0 %v961
        %972 = vmatpush.xpose.msra.mxu0 %v958
        %973 = vmatpush.xpose.msra.mxu0 %v955
        %974 = vmatpush.xpose.msra.mxu0 %v952
        %975 = vmatpush.xpose.msra.mxu0 %v949
        %976 = vmatpush.xpose.msra.mxu0 %v946
        %977 = vmatpush.xpose.msra.mxu0 %v943
        %978 = vmatpush.xpose.msra.mxu0 %v940
        %979 = vmatpush.xpose.msra.mxu0 %v937
        %980 = vmatpush.xpose.msra.mxu0 %v934
        %981 = vmatpush.xpose.msra.mxu0 %v931
        %982 = vmatpush.xpose.msra.mxu0 %v928
        %983 = vmatpush.xpose.msra.mxu0 %v925
        %984 = vmatpush.xpose.msra.mxu0 %v922
        %985 = vmatmul.f32.gmra.mxu0 %v919
        %v986 = vpop.f32.mrf.mxu0
        %v987 = vadd.f32 %v917, %v986
        %988 = vdwg.mxu0
        %989 = vst [vmem:[%s285] sm:$0x1] %v987
        %s990 = sand.u32 %s183, 1
        %s991 = scalar_lea.sflag [#allocation4], %s990
        %s992 = sand.u32 %s183, 1
        %s993 = scalar_lea.vmem [#allocation3], %s992
        // Predicated region
        $region49: #{custom_critic_forward.1} parent=47 // pred_check
          %p994 = pneg %p193
        $region50: #{custom_critic_forward.1} parent=47 // pred_check_branch
          %996 = sbr.rel (%p994) target = $region52
        $region51: #{custom_critic_forward.1} parent=47 // pred_region
          %998 = vsyncadd %s991, 0
          %s999 = scalar_lea.hbm %s7, %s23
          %s1001 = sshll.u32 %s993, 4
          %s1002 = int_to_ptr.vmem [resolvable:$true] %s1001
          %s1003 = sshll.u32 %s999, 4
          %s1004 = int_to_ptr.hbm [resolvable:$true] %s1003
          %1006 = dma.vmem_to_hbm [thread:$0]  %s1002, 16, %s1004, %s991
        $region52: #{custom_critic_forward.1} parent=47 // pred_fallthru
          _
      $region48: #{custom_critic_forward.1} parent=5 // pred_fallthru
        _
      %p1007 = scmp.le.s32.totalorder 2, %s18
      // Predicated region
      $region53: #{custom_critic_forward.1} parent=5 // pred_check
        %p1008 = pneg %p1007
      $region54: #{custom_critic_forward.1} parent=5 // pred_check_branch
        %1010 = sbr.rel (%p1008) target = $region56
      $region55: #{custom_critic_forward.1} parent=5 // pred_region
        %s1011 = ssub.s32 %s18, 2
        // Predicated region
        $region57: #{custom_critic_forward.1} parent=55 // pred_check
          %p1012 = pneg %p199
        $region58: #{custom_critic_forward.1} parent=55 // pred_check_branch
          %1014 = sbr.rel (%p1012) target = $region60
        $region59: #{custom_critic_forward.1} parent=55 // pred_region
          %s1015 = sand.u32 %s184, 1
          %s1016 = scalar_lea.sflag [#allocation4], %s1015
          %s1017 = sand.u32 %s184, 1
          %s1018 = scalar_lea.vmem [#allocation3], %s1017
          %1020 = dma.done %s1016, 16
        $region60: #{custom_critic_forward.1} parent=55 // pred_fallthru
          _
      $region56: #{custom_critic_forward.1} parent=5 // pred_fallthru
        _
    $region6: #{custom_critic_forward.1} parent=1 // loop_footer
      %s22 = sadd.s32 1, %s18
    $region7: #{custom_critic_forward.1} parent=1 // loop_footer_branch
      %17 = sbr.rel target = $region3
    $region8: #{custom_critic_forward.1} parent=1 // loop_exit
      _
    %1021 = vsyncpa [#allocation4], 1
    %s1022 = scalar_lea.sflag [#allocation4], 1
    %1023 = vsyncpa %s1022, 1

</llo_original>
